<compile_context>
chip_gen: v5e
topology: v5e:2x2
jax: 0.10.0
libtpu: 0.0.40
codegen_flags: <defaults>
</compile_context>

<pallas_src>
import functools

import jax
import jax.numpy as jnp
from jax.experimental import pallas as pl
from jax.experimental.pallas import tpu as pltpu


def _round_up(x, m):
    return ((x + m - 1) // m) * m


def _fnn_kernel(n_hidden, n_fields, idx_ref, iota_ref, g_ref, *refs):
    """Kernel body (everything transposed: [features, batch_tile]).

    idx_ref:  [8k, TB] int32 — rows 0..F-1: raw per-field (local) indices;
              row F is all-zero (the "bias virtual field"); rest is padding.
    iota_ref: [PAD, TB] int32 — hoisted sublane iota 0..PAD-1 (constant block).
    g_ref:    [D1+8, (F+1)*PAD] f32 — fused (embedding + BN-folded Linear1 + bias
              + constant-1 row) table.
    refs:     per remaining hidden layer an augmented W^T f32 [Dl+8, D_{l-1}+8]
              (bias + constant-1 propagation built in), then the augmented final
              projection wo f32 [Dlast+8, 1], then the output ref.
    """
    out_ref = refs[-1]
    w_refs = refs[:-1]

    idx = idx_ref[...]        # [8k, TB] int32
    io = iota_ref[...]        # [PAD, TB] int32

    # One-hot, built one 8-row-aligned field slice at a time (f == n_fields is the
    # constant-1 "bias field": its index row is all-zero).  All f32, no bf16 VPU math.
    parts = [(io == idx[f:f + 1, :]).astype(jnp.float32)
             for f in range(n_fields + 1)]
    oht = jnp.concatenate(parts, axis=0)                    # [(F+1)*PAD, TB]

    # Fused: embedding lookup + Linear1 + BN1 + bias in one MXU matmul.
    h = jnp.dot(g_ref[...], oht, preferred_element_type=jnp.float32)
    h = jnp.maximum(h, 0.0)                                 # [D1+8, TB], row D1 == 1

    # Remaining hidden layers: Linear (BN + bias folded into the matmul) + ReLU.
    for l in range(n_hidden - 1):
        h = jnp.dot(w_refs[l][...], h, preferred_element_type=jnp.float32)
        h = jnp.maximum(h, 0.0)                             # constant-1 row preserved

    # Final N=1 projection (bias rides the constant-1 row): VPU mul + sublane reduce.
    wo = w_refs[n_hidden - 1][...]                          # [Dlast+8, 1]
    logits = jnp.sum(h * wo, axis=0, keepdims=True)         # [1, TB]
    out_ref[...] = jax.nn.sigmoid(logits)                   # lane-dense store


def init_params(key, field_dims, embed_dim, mlp_dims):
    """Raw (torch-layout) parameters: embeddings, Linear + BatchNorm1d stats."""
    vocab = int(sum(field_dims))
    n_fields = len(field_dims)
    embed_out = n_fields * (embed_dim + 1)

    keys = jax.random.split(key, 3 + 2 * len(mlp_dims) + 1)
    params = {
        "lin_table": 0.1 * jax.random.normal(keys[0], (vocab, 1), jnp.float32),
        "cross_table": 0.1 * jax.random.normal(keys[1], (vocab, embed_dim), jnp.float32),
        "mlp": [],
    }
    din = embed_out
    kidx = 2
    for dout in mlp_dims:
        w = (1.0 / jnp.sqrt(din)) * jax.random.normal(keys[kidx], (din, dout), jnp.float32)
        b = 0.01 * jax.random.normal(keys[kidx + 1], (1, dout), jnp.float32)
        kidx += 2
        params["mlp"].append({
            "W": w, "b": b,
            "gamma": jnp.ones((1, dout), jnp.float32),
            "beta": jnp.zeros((1, dout), jnp.float32),
            "running_mean": jnp.zeros((1, dout), jnp.float32),
            "running_var": jnp.ones((1, dout), jnp.float32),
        })
        din = dout
    params["W_out"] = (1.0 / jnp.sqrt(din)) * jax.random.normal(keys[kidx], (din, 1), jnp.float32)
    params["b_out"] = jnp.zeros((1, 1), jnp.float32)
    return params


def pack_params(params, field_dims, embed_dim):
    """One-time packing (hoisted out of the forward pass):
    fold BN into each Linear, fuse embedding + first Linear + bias into one table
    indexed by the raw per-field index, and fold every remaining bias into its
    matmul via a propagated constant-1 row.  All weights kept in f32."""
    field_dims = tuple(int(d) for d in field_dims)
    n_fields = len(field_dims)
    emb = embed_dim
    layers = params["mlp"]
    assert len(layers) >= 1, "FNN MLP needs at least one hidden layer"

    pad_len = _round_up(max(max(field_dims), 8), 8)          # per-field column block
    offsets = [0]
    for d in field_dims[:-1]:
        offsets.append(offsets[-1] + d)

    def fold(layer):
        s = layer["gamma"][0] * jax.lax.rsqrt(layer["running_var"][0] + 1e-5)
        w = layer["W"] * s[None, :]
        b = (layer["b"][0] - layer["running_mean"][0]) * s + layer["beta"][0]
        return w, b                                          # [din, dout], [dout]

    # --- Fused first layer: gT[D1+8, (F+1)*pad_len] -------------------------
    w1, b1 = fold(layers[0])                                 # [F*(E+1), D1], [D1]
    d1 = int(w1.shape[1])
    lin = params["lin_table"][:, 0]                          # [V]
    cross = params["cross_table"]                            # [V, E]

    k_cols = (n_fields + 1) * pad_len
    gT = jnp.zeros((d1 + 8, k_cols), jnp.float32)
    for f in range(n_fields):
        sl = slice(offsets[f], offsets[f] + field_dims[f])
        w_lin = w1[f, :]                                                   # [D1]
        w_cross = w1[n_fields + f * emb: n_fields + (f + 1) * emb, :]      # [E, D1]
        blk = w_lin[:, None] * lin[None, sl] + w_cross.T @ cross[sl].T     # [D1, dims_f]
        gT = gT.at[:d1, f * pad_len: f * pad_len + field_dims[f]].set(blk)
    bias_col = n_fields * pad_len                            # "bias virtual field", local idx 0
    gT = gT.at[:d1, bias_col].set(b1)                        # folded bias rides the MXU
    gT = gT.at[d1, bias_col].set(1.0)                        # constant-1 output row

    # --- Remaining hidden layers: augmented W^T [Dl+8, D_{l-1}+8] ------------
    hidden = []
    din = d1
    for layer in layers[1:]:
        w, b = fold(layer)                                   # [din, dout], [dout]
        dout = int(w.shape[1])
        wt = jnp.zeros((dout + 8, din + 8), jnp.float32)
        wt = wt.at[:dout, :din].set(w.T)
        wt = wt.at[:dout, din].set(b)                        # bias from constant-1 row
        wt = wt.at[dout, din].set(1.0)                       # propagate constant-1 row
        hidden.append(wt)
        din = dout

    # --- Final projection: wo[Dlast+8, 1] with b_out on the constant-1 row ---
    wo = jnp.zeros((din + 8, 1), jnp.float32)
    wo = wo.at[:din, 0].set(params["W_out"][:, 0])
    wo = wo.at[din, 0].set(params["b_out"][0, 0])

    return {
        "gT": gT,
        "hidden": hidden,
        "wo": wo,
        "n_fields": n_fields,
        "n_hidden": len(layers),
        "pad_len": pad_len,
    }


def _pick_block_b(bsz, requested):
    """Lane-aligned batch tile.  Large tiles amortize per-step overhead; for
    mid-size batches shrink so the grid has >= 2 steps (v7x: 2 TensorCores)."""
    requested = max(128, (requested // 128) * 128)
    if bsz <= 128:
        return 128
    half = _round_up((bsz + 1) // 2, 128)
    return min(requested, half)


def fnn_forward_pallas(x, packed, *, block_b=512):
    """x: [B, F] int32 raw per-field indices.  Returns [B, 1] f32 probabilities."""
    n_fields = packed["n_fields"]
    n_hidden = packed["n_hidden"]
    pad_len = packed["pad_len"]
    bsz = int(x.shape[0])

    blk = _pick_block_b(bsz, block_b)
    b_pad = _round_up(bsz, blk)
    n_idx_rows = _round_up(n_fields + 1, 8)                  # (8,128)-aligned idx DMA

    # Raw (local) per-field indices, transposed so batch is the lane axis.
    # Row n_fields stays zero: it is the constant-1 "bias field".
    idx_t = jnp.zeros((n_idx_rows, b_pad), jnp.int32)
    idx_t = idx_t.at[:n_fields, :bsz].set(x.astype(jnp.int32).T)

    # Hoisted iota (constant-index VMEM input, not regenerated per grid step).
    iota = jax.lax.broadcasted_iota(jnp.int32, (pad_len, blk), 0)

    weights = [packed["gT"], *packed["hidden"], packed["wo"]]
    kernel = functools.partial(_fnn_kernel, n_hidden, n_fields)

    out = pl.pallas_call(
        kernel,
        out_shape=jax.ShapeDtypeStruct((1, b_pad), jnp.float32),
        grid=(b_pad // blk,),
        in_specs=[pl.BlockSpec((n_idx_rows, blk), lambda i: (0, i)),
                  pl.BlockSpec((pad_len, blk), lambda i: (0, 0))]
                 + [pl.BlockSpec(w.shape, lambda i: (0, 0)) for w in weights],
        out_specs=pl.BlockSpec((1, blk), lambda i: (0, i)),
        compiler_params=pltpu.CompilerParams(
            dimension_semantics=("parallel",)),
    )(idx_t, iota, *weights)
    return out[0, :bsz].reshape(bsz, 1)


def fnn_forward_ref(x, params, field_dims, embed_dim):
    """Pure-JAX f32 reference matching the PyTorch module (eval mode)."""
    offsets = jnp.asarray(
        [0] + list(jnp.cumsum(jnp.asarray(field_dims))[:-1]), jnp.int32)
    idx = x.astype(jnp.int32) + offsets[None, :]
    w = params["lin_table"][idx, 0]                                 # [B, F]
    v = params["cross_table"][idx].reshape(x.shape[0], -1)          # [B, F*E]
    h = jnp.concatenate([w, v], axis=1)
    for layer in params["mlp"]:
        h = h @ layer["W"] + layer["b"]
        h = (h - layer["running_mean"]) * jax.lax.rsqrt(layer["running_var"] + 1e-5)
        h = h * layer["gamma"] + layer["beta"]
        h = jnp.maximum(h, 0.0)
    logits = h @ params["W_out"] + params["b_out"]
    return jax.nn.sigmoid(logits)


if __name__ == "__main__":
    field_dims = (5, 7, 4, 6)     # 4 fields, total vocab = 22
    embed_dim = 4
    mlp_dims = (32, 16)
    batch = 8

    key = jax.random.PRNGKey(0)
    key_p, key_x = jax.random.split(key)
    params = init_params(key_p, field_dims, embed_dim, mlp_dims)
    packed = pack_params(params, field_dims, embed_dim)   # one-time param packing

    maxs = jnp.asarray(field_dims, jnp.int32)[None, :]
    x = (jax.random.randint(key_x, (batch, len(field_dims)), 0, 10_000) % maxs).astype(jnp.int32)

    out = fnn_forward_pallas(x, packed)
    out = jax.block_until_ready(out)

    ref = fnn_forward_ref(x, params, field_dims, embed_dim)
    assert out.shape == (batch, 1)
    # All weights/activations are f32 now; observed error is far below this, the
    # loose tolerance just guards against MXU pass-decomposition differences.
    assert jnp.allclose(out, ref, atol=2e-2, rtol=2e-2), (out, ref)
    print("KERNEL_OK")
</pallas_src>

<mosaic_0001>
module attributes {stable_mosaic.version = 11 : i64} {
  func.func @_fnn_kernel(%arg0: i32, %arg1: memref<8x128xi32, #tpu.memory_space<vmem>>, %arg2: memref<8x128xi32, #tpu.memory_space<vmem>>, %arg3: memref<40x40xf32, #tpu.memory_space<vmem>>, %arg4: memref<24x40xf32, #tpu.memory_space<vmem>>, %arg5: memref<24x1xf32, #tpu.memory_space<vmem>>, %arg6: memref<1x128xf32, #tpu.memory_space<vmem>>) attributes {dimension_semantics = [#tpu.dimension_semantics<parallel>], iteration_bounds = array<i64: 1>, scalar_prefetch = 0 : i64, scratch_operands = 0 : i64, tpu.core_type = #tpu.core_type<tc>, window_params = [{transform_indices = @transform_0, window_bounds = array<i64: 8, 128>}, {pipeline_mode = #tpu.pipeline_mode<synchronous>, transform_indices = @transform_1, window_bounds = array<i64: 8, 128>}, {pipeline_mode = #tpu.pipeline_mode<synchronous>, transform_indices = @transform_2, window_bounds = array<i64: 40, 40>}, {pipeline_mode = #tpu.pipeline_mode<synchronous>, transform_indices = @transform_3, window_bounds = array<i64: 24, 40>}, {pipeline_mode = #tpu.pipeline_mode<synchronous>, transform_indices = @transform_4, window_bounds = array<i64: 24, 1>}, {transform_indices = @transform_5, window_bounds = array<i64: 1, 128>}]} {
    %c0 = arith.constant 0 : index
    %c0_0 = arith.constant 0 : index
    %0 = vector.load %arg1[%c0, %c0_0] : memref<8x128xi32, #tpu.memory_space<vmem>>, vector<8x128xi32>
    %c0_1 = arith.constant 0 : index
    %c0_2 = arith.constant 0 : index
    %1 = vector.load %arg2[%c0_1, %c0_2] : memref<8x128xi32, #tpu.memory_space<vmem>>, vector<8x128xi32>
    %2 = vector.extract_strided_slice %0 {offsets = [0, 0], sizes = [1, 128], strides = [1, 1]} : vector<8x128xi32> to vector<1x128xi32>
    %3 = vector.broadcast %2 : vector<1x128xi32> to vector<8x128xi32>
    %4 = arith.cmpi eq, %1, %3 : vector<8x128xi32>
    %5 = arith.extui %4 : vector<8x128xi1> to vector<8x128xi32>
    %6 = arith.sitofp %5 : vector<8x128xi32> to vector<8x128xf32>
    %7 = vector.extract_strided_slice %0 {offsets = [1, 0], sizes = [1, 128], strides = [1, 1]} : vector<8x128xi32> to vector<1x128xi32>
    %8 = vector.broadcast %7 : vector<1x128xi32> to vector<8x128xi32>
    %9 = arith.cmpi eq, %1, %8 : vector<8x128xi32>
    %10 = arith.extui %9 : vector<8x128xi1> to vector<8x128xi32>
    %11 = arith.sitofp %10 : vector<8x128xi32> to vector<8x128xf32>
    %12 = vector.extract_strided_slice %0 {offsets = [2, 0], sizes = [1, 128], strides = [1, 1]} : vector<8x128xi32> to vector<1x128xi32>
    %13 = vector.broadcast %12 : vector<1x128xi32> to vector<8x128xi32>
    %14 = arith.cmpi eq, %1, %13 : vector<8x128xi32>
    %15 = arith.extui %14 : vector<8x128xi1> to vector<8x128xi32>
    %16 = arith.sitofp %15 : vector<8x128xi32> to vector<8x128xf32>
    %17 = vector.extract_strided_slice %0 {offsets = [3, 0], sizes = [1, 128], strides = [1, 1]} : vector<8x128xi32> to vector<1x128xi32>
    %18 = vector.broadcast %17 : vector<1x128xi32> to vector<8x128xi32>
    %19 = arith.cmpi eq, %1, %18 : vector<8x128xi32>
    %20 = arith.extui %19 : vector<8x128xi1> to vector<8x128xi32>
    %21 = arith.sitofp %20 : vector<8x128xi32> to vector<8x128xf32>
    %22 = vector.extract_strided_slice %0 {offsets = [4, 0], sizes = [1, 128], strides = [1, 1]} : vector<8x128xi32> to vector<1x128xi32>
    %23 = vector.broadcast %22 : vector<1x128xi32> to vector<8x128xi32>
    %24 = arith.cmpi eq, %1, %23 : vector<8x128xi32>
    %25 = arith.extui %24 : vector<8x128xi1> to vector<8x128xi32>
    %26 = arith.sitofp %25 : vector<8x128xi32> to vector<8x128xf32>
    %27 = tpu.concatenate %6, %11, %16, %21, %26 in 0 : vector<8x128xf32>, vector<8x128xf32>, vector<8x128xf32>, vector<8x128xf32>, vector<8x128xf32> -> vector<40x128xf32>
    %c0_3 = arith.constant 0 : index
    %c0_4 = arith.constant 0 : index
    %28 = vector.load %arg3[%c0_3, %c0_4] : memref<40x40xf32, #tpu.memory_space<vmem>>, vector<40x40xf32>
    %cst = arith.constant dense<0.000000e+00> : vector<40x128xf32>
    %29 = tpu.matmul %28, %27, %cst {dimension_numbers = #tpu.dot_dimension_numbers<[1], [0], [0], [1], [0, 0, 1, 1], [], []>} : vector<40x40xf32>, vector<40x128xf32>, vector<40x128xf32> -> vector<40x128xf32>
    %cst_5 = arith.constant 0.000000e+00 : f32
    %30 = vector.broadcast %cst_5 : f32 to vector<40x128xf32>
    %31 = arith.maximumf %29, %30 : vector<40x128xf32>
    %c0_6 = arith.constant 0 : index
    %c0_7 = arith.constant 0 : index
    %32 = vector.load %arg4[%c0_6, %c0_7] : memref<24x40xf32, #tpu.memory_space<vmem>>, vector<24x40xf32>
    %cst_8 = arith.constant dense<0.000000e+00> : vector<24x128xf32>
    %33 = tpu.matmul %32, %31, %cst_8 {dimension_numbers = #tpu.dot_dimension_numbers<[1], [0], [0], [1], [0, 0, 1, 1], [], []>} : vector<24x40xf32>, vector<40x128xf32>, vector<24x128xf32> -> vector<24x128xf32>
    %cst_9 = arith.constant 0.000000e+00 : f32
    %34 = vector.broadcast %cst_9 : f32 to vector<24x128xf32>
    %35 = arith.maximumf %33, %34 : vector<24x128xf32>
    %c0_10 = arith.constant 0 : index
    %c0_11 = arith.constant 0 : index
    %36 = vector.load %arg5[%c0_10, %c0_11] : memref<24x1xf32, #tpu.memory_space<vmem>>, vector<24x1xf32>
    %37 = vector.broadcast %36 : vector<24x1xf32> to vector<24x128xf32>
    %38 = arith.mulf %35, %37 : vector<24x128xf32>
    %cst_12 = arith.constant dense<0.000000e+00> : vector<128xf32>
    %39 = vector.multi_reduction <add>, %38, %cst_12 [0] : vector<24x128xf32> to vector<128xf32>
    %40 = vector.shape_cast %39 : vector<128xf32> to vector<1x128xf32>
    %41 = arith.negf %40 : vector<1x128xf32>
    %42 = math.exp %41 : vector<1x128xf32>
    %cst_13 = arith.constant 1.000000e+00 : f32
    %43 = vector.broadcast %cst_13 : f32 to vector<1x128xf32>
    %44 = arith.addf %43, %42 : vector<1x128xf32>
    %45 = arith.divf %43, %44 : vector<1x128xf32>
    %c0_14 = arith.constant 0 : index
    %c0_15 = arith.constant 0 : index
    %46 = vector.load %arg6[%c0_14, %c0_15] : memref<1x128xf32, #tpu.memory_space<vmem>>, vector<1x128xf32>
    tpu.vector_store %arg6[%c0_14, %c0_15], %45 {strides = array<i32>} : memref<1x128xf32, #tpu.memory_space<vmem>>, vector<1x128xf32>,
    return
  }
  func.func @transform_0(%arg0: i32) -> (i32, i32) {
    %c0_i32 = arith.constant 0 : i32
    %c0_i32_0 = arith.constant 0 : i32
    return %c0_i32, %arg0 : i32, i32
  }
  func.func @transform_1(%arg0: i32) -> (i32, i32) {
    %c0_i32 = arith.constant 0 : i32
    %c0_i32_0 = arith.constant 0 : i32
    %c0_i32_1 = arith.constant 0 : i32
    return %c0_i32, %c0_i32_0 : i32, i32
  }
  func.func @transform_2(%arg0: i32) -> (i32, i32) {
    %c0_i32 = arith.constant 0 : i32
    %c0_i32_0 = arith.constant 0 : i32
    %c0_i32_1 = arith.constant 0 : i32
    return %c0_i32, %c0_i32_0 : i32, i32
  }
  func.func @transform_3(%arg0: i32) -> (i32, i32) {
    %c0_i32 = arith.constant 0 : i32
    %c0_i32_0 = arith.constant 0 : i32
    %c0_i32_1 = arith.constant 0 : i32
    return %c0_i32, %c0_i32_0 : i32, i32
  }
  func.func @transform_4(%arg0: i32) -> (i32, i32) {
    %c0_i32 = arith.constant 0 : i32
    %c0_i32_0 = arith.constant 0 : i32
    %c0_i32_1 = arith.constant 0 : i32
    return %c0_i32, %c0_i32_0 : i32, i32
  }
  func.func @transform_5(%arg0: i32) -> (i32, i32) {
    %c0_i32 = arith.constant 0 : i32
    %c0_i32_0 = arith.constant 0 : i32
    return %c0_i32, %arg0 : i32, i32
  }
}

</mosaic_0001>

<llo_original>
// kernel: tpu_custom_call.1
$region0: #{tpu_custom_call.1}
  #allocation0 [shape = 'u32[]', space=smem, size = 0x4, offset = 0x4, fixed_abs, tag = 'smem constant byte address 0x4 - core index']
  #allocation1 [shape = 'u32[72,128]{1,0:T(1,128)}', space=vmem, size = 0x9000, scoped, tag = 'internal scratch']
  %s0 = inlined_call_operand.hbm [shape: s32[8,128], index: 0, kind: input, shape index: {}]
  %s1 = inlined_call_operand.hbm [shape: s32[8,128], index: 1, kind: input, shape index: {}]
  %s2 = inlined_call_operand.hbm [shape: f32[40,40], index: 2, kind: input, shape index: {}]
  %s3 = inlined_call_operand.vmem [shape: f32[24,40], index: 3, kind: input, shape index: {}]
  %s4 = inlined_call_operand.vmem [shape: f32[24,1], index: 4, kind: input, shape index: {}]
  %s5 = inlined_call_operand.hbm [shape: f32[1,128], index: 5, kind: output, shape index: {}]
  %s6 = sld [smem:[#allocation0]]
  $region42: #{tpu_custom_call.1} parent=0
    _
  %s8 = ssub.s32 1, %s6
  %s9 = scalar_select 0, %s8, %s6
  $region1: #{tpu_custom_call.1} parent=0
    #allocation2 [shape = 'u8[4096]{0}', space=vmem, size = 0x1000, scoped, tag = 'input window, operand 0, single buffered']
    #allocation3 [shape = 's32[1]{0}', space=sflag, size = 0x4, scoped, tag = 'scoped memory for tpu_custom_call.1']
    #allocation4 [shape = 's32[1]{0}', space=sflag, size = 0x4, scoped, tag = 'scoped memory for tpu_custom_call.1']
    #allocation5 [shape = 'u8[4096]{0}', space=vmem, size = 0x1000, scoped, tag = 'input window, operand 1, single buffered']
    #allocation6 [shape = 's32[1]{0}', space=sflag, size = 0x4, scoped, tag = 'scoped memory for tpu_custom_call.1']
    #allocation7 [shape = 'u8[20480]{0}', space=vmem, size = 0x5000, scoped, tag = 'input window, operand 2, single buffered']
    #allocation8 [shape = 'u8[512]{0}', space=vmem, size = 0x400, scoped, tag = 'output window, operand 0, single buffered']
    %10 = vsyncpa [#allocation3], 0
    %11 = vsyncpa [#allocation6], 0
    %12 = vsyncpa [#allocation4], 0
    // Predicated region
    $region2: #{tpu_custom_call.1} parent=1 // pred_check
      _
    $region3: #{tpu_custom_call.1} parent=1 // pred_check_branch
      %14 = sbr.rel (0) target = $region5
    $region4: #{tpu_custom_call.1} parent=1 // pred_region
      %16 = vsyncadd [#allocation3], 0
      %s18 = sshll.u32 %s0, 4
      %s19 = int_to_ptr.hbm [resolvable:$true] %s18
      %s20 = sshll.u32 [#allocation2], 4
      %s21 = int_to_ptr.vmem [resolvable:$true] %s20
      %23 = dma.hbm_to_vmem [thread:$0]  %s19, 128, %s21, [#allocation3]
    $region5: #{tpu_custom_call.1} parent=1 // pred_fallthru
      _
    // Predicated region
    $region6: #{tpu_custom_call.1} parent=1 // pred_check
      _
    $region7: #{tpu_custom_call.1} parent=1 // pred_check_branch
      %25 = sbr.rel (0) target = $region9
    $region8: #{tpu_custom_call.1} parent=1 // pred_region
      %27 = vsyncadd [#allocation6], 0
      %s29 = sshll.u32 %s1, 4
      %s30 = int_to_ptr.hbm [resolvable:$true] %s29
      %s31 = sshll.u32 [#allocation5], 4
      %s32 = int_to_ptr.vmem [resolvable:$true] %s31
      %34 = dma.hbm_to_vmem [thread:$0]  %s30, 128, %s32, [#allocation6]
    $region9: #{tpu_custom_call.1} parent=1 // pred_fallthru
      _
    // Predicated region
    $region10: #{tpu_custom_call.1} parent=1 // pred_check
      _
    $region11: #{tpu_custom_call.1} parent=1 // pred_check_branch
      %36 = sbr.rel (0) target = $region13
    $region12: #{tpu_custom_call.1} parent=1 // pred_region
      %38 = vsyncadd [#allocation6], 0
      %s39 = sshll.u32 %s2, 4
      %s40 = int_to_ptr.hbm [resolvable:$true] %s39
      %s41 = sshll.u32 [#allocation7], 4
      %s42 = int_to_ptr.vmem [resolvable:$true] %s41
      %47 = dma.hbm_to_vmem [thread:$0]  %s40, 640, %s42, [#allocation6], 128, 128, 8
    $region13: #{tpu_custom_call.1} parent=1 // pred_fallthru
      _
    // Predicated region
    $region14: #{tpu_custom_call.1} parent=1 // pred_check
      _
    $region15: #{tpu_custom_call.1} parent=1 // pred_check_branch
      %49 = sbr.rel (0) target = $region17
    $region16: #{tpu_custom_call.1} parent=1 // pred_region
      _
    $region17: #{tpu_custom_call.1} parent=1 // pred_fallthru
      _
    // Predicated region
    $region18: #{tpu_custom_call.1} parent=1 // pred_check
      _
    $region19: #{tpu_custom_call.1} parent=1 // pred_check_branch
      %51 = sbr.rel (0) target = $region21
    $region20: #{tpu_custom_call.1} parent=1 // pred_region
      _
    $region21: #{tpu_custom_call.1} parent=1 // pred_fallthru
      _
    // Predicated region
    $region22: #{tpu_custom_call.1} parent=1 // pred_check
      _
    $region23: #{tpu_custom_call.1} parent=1 // pred_check_branch
      %53 = sbr.rel (0) target = $region25
    $region24: #{tpu_custom_call.1} parent=1 // pred_region
      %55 = dma.done [#allocation3], 128
    $region25: #{tpu_custom_call.1} parent=1 // pred_fallthru
      _
    // Predicated region
    $region26: #{tpu_custom_call.1} parent=1 // pred_check
      _
    $region27: #{tpu_custom_call.1} parent=1 // pred_check_branch
      %57 = sbr.rel (0) target = $region29
    $region28: #{tpu_custom_call.1} parent=1 // pred_region
      %59 = dma.done [#allocation6], 128
    $region29: #{tpu_custom_call.1} parent=1 // pred_fallthru
      _
    // Predicated region
    $region30: #{tpu_custom_call.1} parent=1 // pred_check
      _
    $region31: #{tpu_custom_call.1} parent=1 // pred_check_branch
      %61 = sbr.rel (0) target = $region33
    $region32: #{tpu_custom_call.1} parent=1 // pred_region
      %63 = dma.done [#allocation6], 640
    $region33: #{tpu_custom_call.1} parent=1 // pred_fallthru
      _
    %v64 = vld [vmem:[#allocation2] sm:$0xff]
    %v65 = vld [vmem:[#allocation5] sm:$0xff]
    %v66 = vperm.slane %v64, 0
    %vm67 = vcmp.eq.s32.totalorder %v65, %v66
    %v68 = vsel %vm67, 1, 0
    %v69 = vcvt.s32.f32 %v68
    %v70 = vperm.slane %v64, 1
    %vm71 = vcmp.eq.s32.totalorder %v65, %v70
    %v72 = vsel %vm71, 1, 0
    %v73 = vcvt.s32.f32 %v72
    %v74 = vperm.slane %v64, 2
    %vm75 = vcmp.eq.s32.totalorder %v65, %v74
    %v76 = vsel %vm75, 1, 0
    %v77 = vcvt.s32.f32 %v76
    %v78 = vperm.slane %v64, 3
    %vm79 = vcmp.eq.s32.totalorder %v65, %v78
    %v80 = vsel %vm79, 1, 0
    %v81 = vcvt.s32.f32 %v80
    %v82 = vperm.slane %v64, 4
    %vm83 = vcmp.eq.s32.totalorder %v65, %v82
    %v84 = vsel %vm83, 1, 0
    %v85 = vcvt.s32.f32 %v84
    %v86 = vld [vmem:[#allocation7] sm:$0xff]
    %v87 = vld [vmem:[#allocation7 + $0x8] sm:$0xff]
    %v88 = vld [vmem:[#allocation7 + $0x10] sm:$0xff]
    %v89 = vld [vmem:[#allocation7 + $0x18] sm:$0xff]
    %v90 = vld [vmem:[#allocation7 + $0x20] sm:$0xff]
    %vm91 = vcmask 326656
    %v93 = vsel %vm91, %v86, 0
    %v96 = vsel %vm91, %v87, 0
    %v99 = vsel %vm91, %v88, 0
    %v102 = vsel %vm91, %v89, 0
    %v105 = vsel %vm91, %v90, 0
    %107 = vmatpush.msra.mxu0 0.0
    %108 = vmatpush.msra.mxu0 0.0
    %109 = vmatpush.msra.mxu0 0.0
    %110 = vmatpush.msra.mxu0 0.0
    %111 = vmatpush.msra.mxu0 0.0
    %112 = vmatpush.msra.mxu0 0.0
    %113 = vmatpush.msra.mxu0 0.0
    %114 = vmatpush.msra.mxu0 0.0
    %115 = vmatpush.msra.mxu0 0.0
    %116 = vmatpush.msra.mxu0 0.0
    %117 = vmatpush.msra.mxu0 0.0
    %118 = vmatpush.msra.mxu0 %v85
    %119 = vmatpush.msra.mxu0 %v81
    %120 = vmatpush.msra.mxu0 %v77
    %121 = vmatpush.msra.mxu0 %v73
    %122 = vmatpush.msra.mxu0 %v69
    %123 = vmatmul.f32.gmra.mxu0 %v93
    %v124 = vpop.f32.mrf.mxu0
    %v125 = vadd.f32 0.0, %v124
    %126 = vmatmul.f32.gmra.mxu0 %v96
    %v127 = vpop.f32.mrf.mxu0
    %v128 = vadd.f32 0.0, %v127
    %129 = vmatmul.f32.gmra.mxu0 %v99
    %v130 = vpop.f32.mrf.mxu0
    %v131 = vadd.f32 0.0, %v130
    %132 = vmatmul.f32.gmra.mxu0 %v102
    %v133 = vpop.f32.mrf.mxu0
    %v134 = vadd.f32 0.0, %v133
    %135 = vmatmul.f32.gmra.mxu0 %v105
    %v136 = vpop.f32.mrf.mxu0
    %v137 = vadd.f32 0.0, %v136
    %138 = vdwg.mxu0
    %v139 = vmax.f32 %v125, 0.0
    %v140 = vmax.f32 %v128, 0.0
    %v141 = vmax.f32 %v131, 0.0
    %v142 = vmax.f32 %v134, 0.0
    %v143 = vmax.f32 %v137, 0.0
    %v144 = vld [vmem:[%s3] sm:$0xff]
    %v145 = vld [vmem:[%s3 + $0x8] sm:$0xff]
    %v146 = vld [vmem:[%s3 + $0x10] sm:$0xff]
    %v148 = vsel %vm91, %v144, 0
    %v151 = vsel %vm91, %v145, 0
    %v154 = vsel %vm91, %v146, 0
    %156 = vmatpush.msra.mxu0 0.0
    %157 = vmatpush.msra.mxu0 0.0
    %158 = vmatpush.msra.mxu0 0.0
    %159 = vmatpush.msra.mxu0 0.0
    %160 = vmatpush.msra.mxu0 0.0
    %161 = vmatpush.msra.mxu0 0.0
    %162 = vmatpush.msra.mxu0 0.0
    %163 = vmatpush.msra.mxu0 0.0
    %164 = vmatpush.msra.mxu0 0.0
    %165 = vmatpush.msra.mxu0 0.0
    %166 = vmatpush.msra.mxu0 0.0
    %167 = vmatpush.msra.mxu0 %v143
    %168 = vmatpush.msra.mxu0 %v142
    %169 = vmatpush.msra.mxu0 %v141
    %170 = vmatpush.msra.mxu0 %v140
    %171 = vmatpush.msra.mxu0 %v139
    %172 = vmatmul.f32.gmra.mxu0 %v148
    %v173 = vpop.f32.mrf.mxu0
    %v174 = vadd.f32 0.0, %v173
    %175 = vmatmul.f32.gmra.mxu0 %v151
    %v176 = vpop.f32.mrf.mxu0
    %v177 = vadd.f32 0.0, %v176
    %178 = vmatmul.f32.gmra.mxu0 %v154
    %v179 = vpop.f32.mrf.mxu0
    %v180 = vadd.f32 0.0, %v179
    %181 = vdwg.mxu0
    %v182 = vmax.f32 %v174, 0.0
    %v183 = vmax.f32 %v177, 0.0
    %v184 = vmax.f32 %v180, 0.0
    %v185 = vld [vmem:[%s4] sm:$0xff]
    %v186 = vld [vmem:[%s4 + $0x8] sm:$0xff]
    %v187 = vld [vmem:[%s4 + $0x10] sm:$0xff]
    %189 = vset.pattern.permute.xlu0 0
    %190 = vperm.xlu0 %189, %v185
    %v191 = vpop.permute.xlu0 %190
    %194 = vset.pattern.permute.xlu0 0
    %195 = vperm.xlu0 %194, %v186
    %v196 = vpop.permute.xlu0 %195
    %199 = vset.pattern.permute.xlu0 0
    %200 = vperm.xlu0 %199, %v187
    %v201 = vpop.permute.xlu0 %200
    %v203 = vmul.f32 %v182, %v191
    %v204 = vmul.f32 %v183, %v196
    %v205 = vmul.f32 %v184, %v201
    %v206 = vadd.f32 %v203, %v204
    %v207 = vadd.f32 %v206, %v205
    %v208 = vrot.slane %v207, 4
    %v209 = vadd.f32 %v207, %v208
    %v210 = vrot.slane %v209, 2
    %v211 = vadd.f32 %v209, %v210
    %v212 = vrot.slane %v211, 1
    %v213 = vadd.f32 %v211, %v212
    %v214 = vxor.u32 %v213, 2147483648
    %v215 = vmul.f32 %v214, 1.442695
    %v216 = vpow.pop %v215
    %v217 = vadd.f32 %v216, 1.0
    %v218 = vrcp.pop %v217
    %v219 = vmul.f32 %v217, %v218
    %v220 = vsub.f32 1.0, %v219
    %v221 = vmul.f32 %v218, %v220
    %v222 = vadd.f32 %v218, %v221
    %vm223 = vweird.f32 %v217
    %vm224 = vweird.f32 %v218
    %vm225 = vmor %vm223, %vm224
    %v226 = vsel %vm225, %v218, %v222
    %v227 = vand.u32 2147483647, %v217
    %vm228 = vcmp.eq.f32.partialorder %v227, 8.507059e+37
    %v229 = vand.u32 %v217, 2147483648
    %v230 = vor.u32 1.1754944e-38, %v229
    %v231 = vsel %vm228, %v230, %v226
    %v232 = vmul.f32 1.0, %v231
    %233 = vst [vmem:[#allocation8] sm:$0x1] %v232
    // Predicated region
    $region34: #{tpu_custom_call.1} parent=1 // pred_check
      _
    $region35: #{tpu_custom_call.1} parent=1 // pred_check_branch
      %235 = sbr.rel (0) target = $region37
    $region36: #{tpu_custom_call.1} parent=1 // pred_region
      %237 = vsyncadd [#allocation4], 0
      %s239 = sshll.u32 [#allocation8], 4
      %s240 = int_to_ptr.vmem [resolvable:$true] %s239
      %s241 = sshll.u32 %s5, 4
      %s242 = int_to_ptr.hbm [resolvable:$true] %s241
      %244 = dma.vmem_to_hbm [thread:$0]  %s240, 16, %s242, [#allocation4]
    $region37: #{tpu_custom_call.1} parent=1 // pred_fallthru
      _
    // Predicated region
    $region38: #{tpu_custom_call.1} parent=1 // pred_check
      _
    $region39: #{tpu_custom_call.1} parent=1 // pred_check_branch
      %246 = sbr.rel (0) target = $region41
    $region40: #{tpu_custom_call.1} parent=1 // pred_region
      %248 = dma.done [#allocation4], 16
    $region41: #{tpu_custom_call.1} parent=1 // pred_fallthru
      _
    %249 = vsyncpa [#allocation3], 1
    %250 = vsyncpa [#allocation6], 1
    %251 = vsyncpa [#allocation4], 1

</llo_original>
